<compile_context>
chip_gen: v7x
topology: tpu7x:2x2x1
jax: 0.10.0
libtpu: 0.0.40
codegen_flags: <defaults>
</compile_context>

<pallas_src>
import jax
import jax.numpy as jnp
from jax.experimental import pallas as pl
from jax.experimental.pallas import tpu as pltpu

HIDDEN_SIZE = 16   # fused away (fc1 -> fc2 with no nonlinearity in between)
INOUT_DIM = 2


def fused_matmul_kernel(p_ref, x_ref, o_ref):
    """y = x @ W_f + b_f in the interleaved [rows, 128] layout.

    p_ref: VMEM [8,128] per-lane coefficients (resident across the grid):
           row 0: a_self = even lane? W_f[0,0] : W_f[1,1]
           row 1: c_next = even lane? W_f[1,0] : 0        (pairs with x[l+1])
           row 2: c_prev = even lane? 0        : W_f[0,1] (pairs with x[l-1])
           row 3: b_lane = even lane? b_f[0]   : b_f[1]
    x_ref: VMEM [tr,128] input block (flat row-major view of [B,2]:
           even lane = feature 0, odd lane = feature 1 of one batch row).
    o_ref: VMEM [tr,128] output block, same interleaved layout.
    """
    x = x_ref[...]
    a_self = p_ref[0:1, :]
    c_next = p_ref[1:2, :]
    c_prev = p_ref[2:3, :]
    b_lane = p_ref[3:4, :]
    # XLU lane rotations (np.roll semantics):
    #   r_next[:, l] = x[:, (l+1) % 128],  r_prev[:, l] = x[:, (l-1) % 128].
    # Wrap-around lanes always meet an exact-zero coefficient, so they never
    # contribute.
    r_next = pltpu.roll(x, 127, axis=1)
    r_prev = pltpu.roll(x, 1, axis=1)
    # One full-block, lane-dense, unmasked store (no concatenate).
    o_ref[...] = a_self * x + c_next * r_next + c_prev * r_prev + b_lane


def _forward_impl(x, w1, b1, w2, b2, *, tr, core_parallel):
    B = x.shape[0]
    dt = x.dtype

    # --- Exact fusion of the two linear layers. ---
    w_f = (w1 @ w2).astype(jnp.float32)        # [2, 2]
    b_f = (b1 @ w2 + b2).astype(jnp.float32)   # [2]

    # --- Per-lane coefficient vectors (feature parity alternates on lanes). ---
    lane = jnp.arange(128)
    even = (lane % 2) == 0
    p = jnp.zeros((8, 128), jnp.float32)
    p = p.at[0].set(jnp.where(even, w_f[0, 0], w_f[1, 1]))
    p = p.at[1].set(jnp.where(even, w_f[1, 0], 0.0))
    p = p.at[2].set(jnp.where(even, 0.0, w_f[0, 1]))
    p = p.at[3].set(jnp.where(even, b_f[0], b_f[1]))
    p = p.astype(dt)

    # --- Zero-copy interleaved view of the row-major [B,2] buffer. ---
    rows_needed = pl.cdiv(2 * B, 128)
    tr = max(8, min(tr, pl.cdiv(rows_needed, 8) * 8))   # multiple of 8 sublanes
    rows = pl.cdiv(rows_needed, tr) * tr                 # pad rows to block size
    bp = rows * (128 // INOUT_DIM)                       # padded batch
    x_flat = jnp.pad(x, ((0, bp - B), (0, 0))).reshape(rows, 128)

    num_blocks = rows // tr
    if num_blocks < 2:
        core_parallel = False
    semantics = pltpu.CORE_PARALLEL if core_parallel else "parallel"

    out_flat = pl.pallas_call(
        fused_matmul_kernel,
        out_shape=jax.ShapeDtypeStruct((rows, 128), dt),
        grid_spec=pltpu.PrefetchScalarGridSpec(
            num_scalar_prefetch=0,
            grid=(num_blocks,),
            in_specs=[
                pl.BlockSpec((8, 128), lambda i: (0, 0)),    # coefficients (resident)
                pl.BlockSpec((tr, 128), lambda i: (i, 0)),   # x block
            ],
            out_specs=pl.BlockSpec((tr, 128), lambda i: (i, 0)),
        ),
        compiler_params=pltpu.CompilerParams(
            dimension_semantics=(semantics,)),
        cost_estimate=pl.CostEstimate(
            flops=6 * rows * 128,
            transcendentals=0,
            bytes_accessed=2 * rows * 128 * dt.itemsize),
    )(p, x_flat)

    # Zero-copy reshape back to [bp, 2]; crop the padded batch rows.
    return out_flat.reshape(bp, INOUT_DIM)[:B]


def matmul_forward(x, w1, b1, w2, b2, *, tr=2048):
    """Forward of the PyTorch Matmul module: fc2(fc1(x)).  x: [B,2] -> [B,2]."""
    # Prefer CORE_PARALLEL (splits batch tiles across v7x's 2 TensorCores);
    # fall back to plain "parallel" if the chip/toolchain rejects it.
    for core_parallel in (True, False):
        try:
            fn = jax.jit(
                lambda xx, a, b, c, d: _forward_impl(
                    xx, a, b, c, d, tr=tr, core_parallel=core_parallel))
            return jax.block_until_ready(fn(x, w1, b1, w2, b2))
        except Exception:
            if not core_parallel:
                raise
    raise AssertionError("unreachable")


if __name__ == "__main__":
    # Deterministic parameters matching the module's __init__:
    #   fc1.weight = 1.0 (torch [16, 2] -> stored transposed [2, 16] here)
    #   fc2.weight = 1.0 (torch [2, 16] -> stored transposed [16, 2] here)
    #   biases = 0.0
    w1 = jnp.ones((INOUT_DIM, HIDDEN_SIZE), dtype=jnp.float32)
    b1 = jnp.zeros((HIDDEN_SIZE,), dtype=jnp.float32)
    w2 = jnp.ones((HIDDEN_SIZE, INOUT_DIM), dtype=jnp.float32)
    b2 = jnp.zeros((INOUT_DIM,), dtype=jnp.float32)

    # Small example input: 1000 rows of 2 features (exercises the pad to a
    # 16x128 interleaved slab and a single-block grid).
    key = jax.random.PRNGKey(0)
    x = jax.random.normal(key, (1000, INOUT_DIM), dtype=jnp.float32)

    out = matmul_forward(x, w1, b1, w2, b2)
    out = jax.block_until_ready(out)

    # Reference check in plain JAX (same semantics as the torch forward).
    ref = (x @ w1 + b1) @ w2 + b2
    assert out.shape == (1000, INOUT_DIM)
    assert jnp.allclose(out, ref, atol=1e-5, rtol=1e-5), "mismatch vs reference"

    print("KERNEL_OK")
</pallas_src>

<mosaic_0001>
module attributes {stable_mosaic.version = 11 : i64} {
  func.func @fused_matmul_kernel(%arg0: i32, %arg1: memref<8x128xf32, #tpu.memory_space<vmem>>, %arg2: memref<16x128xf32, #tpu.memory_space<vmem>>, %arg3: memref<16x128xf32, #tpu.memory_space<vmem>>) attributes {dimension_semantics = [#tpu.dimension_semantics<parallel>], iteration_bounds = array<i64: 1>, scalar_prefetch = 0 : i64, scratch_operands = 0 : i64, tpu.core_type = #tpu.core_type<tc>, window_params = [{pipeline_mode = #tpu.pipeline_mode<synchronous>, transform_indices = @transform_0, window_bounds = array<i64: 8, 128>}, {transform_indices = @transform_1, window_bounds = array<i64: 16, 128>}, {transform_indices = @transform_2, window_bounds = array<i64: 16, 128>}]} {
    %c0 = arith.constant 0 : index
    %c0_0 = arith.constant 0 : index
    %0 = vector.load %arg2[%c0, %c0_0] : memref<16x128xf32, #tpu.memory_space<vmem>>, vector<16x128xf32>
    %c0_1 = arith.constant 0 : index
    %c0_2 = arith.constant 0 : index
    %1 = vector.load %arg1[%c0_1, %c0_2] : memref<8x128xf32, #tpu.memory_space<vmem>>, vector<1x128xf32>
    %c1 = arith.constant 1 : index
    %c0_3 = arith.constant 0 : index
    %2 = vector.load %arg1[%c1, %c0_3] : memref<8x128xf32, #tpu.memory_space<vmem>>, vector<1x128xf32>
    %c2 = arith.constant 2 : index
    %c0_4 = arith.constant 0 : index
    %3 = vector.load %arg1[%c2, %c0_4] : memref<8x128xf32, #tpu.memory_space<vmem>>, vector<1x128xf32>
    %c3 = arith.constant 3 : index
    %c0_5 = arith.constant 0 : index
    %4 = vector.load %arg1[%c3, %c0_5] : memref<8x128xf32, #tpu.memory_space<vmem>>, vector<1x128xf32>
    %c127_i32 = arith.constant 127 : i32
    %5 = tpu.dynamic_rotate %0 by %c127_i32 dim 1 : vector<16x128xf32>, i32 -> vector<16x128xf32>
    %c1_i32 = arith.constant 1 : i32
    %6 = tpu.dynamic_rotate %0 by %c1_i32 dim 1 : vector<16x128xf32>, i32 -> vector<16x128xf32>
    %7 = vector.broadcast %1 : vector<1x128xf32> to vector<16x128xf32>
    %8 = arith.mulf %7, %0 : vector<16x128xf32>
    %9 = vector.broadcast %2 : vector<1x128xf32> to vector<16x128xf32>
    %10 = arith.mulf %9, %5 : vector<16x128xf32>
    %11 = arith.addf %8, %10 : vector<16x128xf32>
    %12 = vector.broadcast %3 : vector<1x128xf32> to vector<16x128xf32>
    %13 = arith.mulf %12, %6 : vector<16x128xf32>
    %14 = arith.addf %11, %13 : vector<16x128xf32>
    %15 = vector.broadcast %4 : vector<1x128xf32> to vector<16x128xf32>
    %16 = arith.addf %14, %15 : vector<16x128xf32>
    %c0_6 = arith.constant 0 : index
    %c0_7 = arith.constant 0 : index
    %17 = vector.load %arg3[%c0_6, %c0_7] : memref<16x128xf32, #tpu.memory_space<vmem>>, vector<16x128xf32>
    tpu.vector_store %arg3[%c0_6, %c0_7], %16 {strides = array<i32>} : memref<16x128xf32, #tpu.memory_space<vmem>>, vector<16x128xf32>,
    return
  }
  func.func @transform_0(%arg0: i32) -> (i32, i32) {
    %c0_i32 = arith.constant 0 : i32
    %c0_i32_0 = arith.constant 0 : i32
    %c0_i32_1 = arith.constant 0 : i32
    return %c0_i32, %c0_i32_0 : i32, i32
  }
  func.func @transform_1(%arg0: i32) -> (i32, i32) {
    %c0_i32 = arith.constant 0 : i32
    %c0_i32_0 = arith.constant 0 : i32
    return %arg0, %c0_i32 : i32, i32
  }
  func.func @transform_2(%arg0: i32) -> (i32, i32) {
    %c0_i32 = arith.constant 0 : i32
    %c0_i32_0 = arith.constant 0 : i32
    return %arg0, %c0_i32 : i32, i32
  }
}

module attributes {stable_mosaic.version = 11 : i64} {
  func.func @fused_matmul_kernel(%arg0: i32, %arg1: memref<8x128xf32, #tpu.memory_space<vmem>>, %arg2: memref<16x128xf32, #tpu.memory_space<vmem>>, %arg3: memref<16x128xf32, #tpu.memory_space<vmem>>) attributes {dimension_semantics = [#tpu.dimension_semantics<parallel>], iteration_bounds = array<i64: 1>, scalar_prefetch = 0 : i64, scratch_operands = 0 : i64, tpu.core_type = #tpu.core_type<tc>, window_params = [{pipeline_mode = #tpu.pipeline_mode<synchronous>, transform_indices = @transform_0, window_bounds = array<i64: 8, 128>}, {transform_indices = @transform_1, window_bounds = array<i64: 16, 128>}, {transform_indices = @transform_2, window_bounds = array<i64: 16, 128>}]} {
    %c0 = arith.constant 0 : index
    %c0_0 = arith.constant 0 : index
    %0 = vector.load %arg2[%c0, %c0_0] : memref<16x128xf32, #tpu.memory_space<vmem>>, vector<16x128xf32>
    %c0_1 = arith.constant 0 : index
    %c0_2 = arith.constant 0 : index
    %1 = vector.load %arg1[%c0_1, %c0_2] : memref<8x128xf32, #tpu.memory_space<vmem>>, vector<1x128xf32>
    %c1 = arith.constant 1 : index
    %c0_3 = arith.constant 0 : index
    %2 = vector.load %arg1[%c1, %c0_3] : memref<8x128xf32, #tpu.memory_space<vmem>>, vector<1x128xf32>
    %c2 = arith.constant 2 : index
    %c0_4 = arith.constant 0 : index
    %3 = vector.load %arg1[%c2, %c0_4] : memref<8x128xf32, #tpu.memory_space<vmem>>, vector<1x128xf32>
    %c3 = arith.constant 3 : index
    %c0_5 = arith.constant 0 : index
    %4 = vector.load %arg1[%c3, %c0_5] : memref<8x128xf32, #tpu.memory_space<vmem>>, vector<1x128xf32>
    %c127_i32 = arith.constant 127 : i32
    %5 = tpu.dynamic_rotate %0 by %c127_i32 dim 1 : vector<16x128xf32>, i32 -> vector<16x128xf32>
    %c1_i32 = arith.constant 1 : i32
    %6 = tpu.dynamic_rotate %0 by %c1_i32 dim 1 : vector<16x128xf32>, i32 -> vector<16x128xf32>
    %7 = vector.broadcast %1 : vector<1x128xf32> to vector<16x128xf32>
    %8 = arith.mulf %7, %0 : vector<16x128xf32>
    %9 = vector.broadcast %2 : vector<1x128xf32> to vector<16x128xf32>
    %10 = arith.mulf %9, %5 : vector<16x128xf32>
    %11 = arith.addf %8, %10 : vector<16x128xf32>
    %12 = vector.broadcast %3 : vector<1x128xf32> to vector<16x128xf32>
    %13 = arith.mulf %12, %6 : vector<16x128xf32>
    %14 = arith.addf %11, %13 : vector<16x128xf32>
    %15 = vector.broadcast %4 : vector<1x128xf32> to vector<16x128xf32>
    %16 = arith.addf %14, %15 : vector<16x128xf32>
    %c0_6 = arith.constant 0 : index
    %c0_7 = arith.constant 0 : index
    %17 = vector.load %arg3[%c0_6, %c0_7] : memref<16x128xf32, #tpu.memory_space<vmem>>, vector<16x128xf32>
    tpu.vector_store %arg3[%c0_6, %c0_7], %16 {strides = array<i32>} : memref<16x128xf32, #tpu.memory_space<vmem>>, vector<16x128xf32>,
    return
  }
  func.func @transform_0(%arg0: i32) -> (i32, i32) {
    %c0_i32 = arith.constant 0 : i32
    %c0_i32_0 = arith.constant 0 : i32
    %c0_i32_1 = arith.constant 0 : i32
    return %c0_i32, %c0_i32_0 : i32, i32
  }
  func.func @transform_1(%arg0: i32) -> (i32, i32) {
    %c0_i32 = arith.constant 0 : i32
    %c0_i32_0 = arith.constant 0 : i32
    return %arg0, %c0_i32 : i32, i32
  }
  func.func @transform_2(%arg0: i32) -> (i32, i32) {
    %c0_i32 = arith.constant 0 : i32
    %c0_i32_0 = arith.constant 0 : i32
    return %arg0, %c0_i32 : i32, i32
  }
}

</mosaic_0001>

<llo_original>
// kernel: _lambda_.1
$region0: #{_lambda_.1}
  #allocation0 [shape = 'u32[]', space=smem, size = 0x4, offset = 0x4, fixed_abs, tag = 'smem constant byte address 0x4 - core index']
  #allocation1 [shape = 'u32[144,128]{1,0:T(1,128)}', space=vmem, size = 0x12000, scoped, tag = 'internal scratch']
  %s0 = inlined_call_operand.vmem [shape: f32[8,128], index: 0, kind: input, shape index: {}]
  %s1 = inlined_call_operand.vmem [shape: f32[16,128], index: 1, kind: input, shape index: {}]
  %s2 = inlined_call_operand.vmem [shape: f32[16,128], index: 2, kind: output, shape index: {}]
  %s3 = sld [smem:[#allocation0]]
  $region18: #{_lambda_.1} parent=0
    _
  %s5 = ssub.s32 1, %s3
  %s6 = scalar_select 0, %s5, %s3
  // Predicated region
  $region2: #{_lambda_.1} parent=0 // pred_check
    _
  $region3: #{_lambda_.1} parent=0 // pred_check_branch
    %8 = sbr.rel (0) target = $region5
  $region4: #{_lambda_.1} parent=0 // pred_region
    _
  $region5: #{_lambda_.1} parent=0 // pred_fallthru
    _
  // Predicated region
  $region6: #{_lambda_.1} parent=0 // pred_check
    _
  $region7: #{_lambda_.1} parent=0 // pred_check_branch
    %10 = sbr.rel (0) target = $region9
  $region8: #{_lambda_.1} parent=0 // pred_region
    _
  $region9: #{_lambda_.1} parent=0 // pred_fallthru
    _
  %v11 = vld [vmem:[%s1] sm:$0xff]
  %v12 = vld [vmem:[%s1 + $0x8] sm:$0xff]
  %v13 = vld [vmem:[%s0] sm:$0x1]
  %v14 = vld [vmem:[%s0 + $0x1] sm:$0x1]
  %v15 = vld [vmem:[%s0 + $0x2] sm:$0x1]
  %v16 = vld [vmem:[%s0 + $0x3] sm:$0x1]
  %17 = vrot.lane.b32.xlu0 %v11, 127
  %v18 = vpop.permute.xlu0 %17
  %19 = vrot.lane.b32.xlu0 %v12, 127
  %v20 = vpop.permute.xlu0 %19
  %21 = vrot.lane.b32.xlu0 %v11, 1
  %v22 = vpop.permute.xlu0 %21
  %23 = vrot.lane.b32.xlu0 %v12, 1
  %v24 = vpop.permute.xlu0 %23
  %v25 = vlaneseq
  %v26 = vshrl.u32 %v25, 7
  %v27 = vsub.s32 0, %v26
  %v28 = vrot.slane %v13, %v27
  %v29 = vmul.f32 %v28, %v11
  %v30 = vmul.f32 %v28, %v12
  %v31 = vlaneseq
  %v32 = vshrl.u32 %v31, 7
  %v33 = vsub.s32 0, %v32
  %v34 = vrot.slane %v14, %v33
  %v35 = vmul.f32 %v34, %v18
  %v36 = vmul.f32 %v34, %v20
  %v37 = vadd.f32 %v29, %v35
  %v38 = vadd.f32 %v30, %v36
  %v39 = vlaneseq
  %v40 = vshrl.u32 %v39, 7
  %v41 = vsub.s32 0, %v40
  %v42 = vrot.slane %v15, %v41
  %v43 = vmul.f32 %v42, %v22
  %v44 = vmul.f32 %v42, %v24
  %v45 = vadd.f32 %v37, %v43
  %v46 = vadd.f32 %v38, %v44
  %v47 = vlaneseq
  %v48 = vshrl.u32 %v47, 7
  %v49 = vsub.s32 0, %v48
  %v50 = vrot.slane %v16, %v49
  %v51 = vadd.f32 %v45, %v50
  %v52 = vadd.f32 %v46, %v50
  %53 = vst [vmem:[%s2] sm:$0xff] %v51
  %54 = vst [vmem:[%s2 + $0x8] sm:$0xff] %v52
  // Predicated region
  $region10: #{_lambda_.1} parent=0 // pred_check
    _
  $region11: #{_lambda_.1} parent=0 // pred_check_branch
    %56 = sbr.rel (0) target = $region13
  $region12: #{_lambda_.1} parent=0 // pred_region
    _
  $region13: #{_lambda_.1} parent=0 // pred_fallthru
    _
  // Predicated region
  $region14: #{_lambda_.1} parent=0 // pred_check
    _
  $region15: #{_lambda_.1} parent=0 // pred_check_branch
    %58 = sbr.rel (0) target = $region17
  $region16: #{_lambda_.1} parent=0 // pred_region
    _
  $region17: #{_lambda_.1} parent=0 // pred_fallthru
    _

// kernel: _lambda_.1
$region0: #{_lambda_.1}
  #allocation0 [shape = 'u32[]', space=smem, size = 0x4, offset = 0x4, fixed_abs, tag = 'smem constant byte address 0x4 - core index']
  #allocation1 [shape = 'u32[144,128]{1,0:T(1,128)}', space=vmem, size = 0x12000, scoped, tag = 'internal scratch']
  %s0 = inlined_call_operand.vmem [shape: f32[8,128], index: 0, kind: input, shape index: {}]
  %s1 = inlined_call_operand.vmem [shape: f32[16,128], index: 1, kind: input, shape index: {}]
  %s2 = inlined_call_operand.vmem [shape: f32[16,128], index: 2, kind: output, shape index: {}]
  %s3 = sld [smem:[#allocation0]]
  $region18: #{_lambda_.1} parent=0
    _
  %s5 = ssub.s32 1, %s3
  %s6 = scalar_select 0, %s5, %s3
  // Predicated region
  $region2: #{_lambda_.1} parent=0 // pred_check
    _
  $region3: #{_lambda_.1} parent=0 // pred_check_branch
    %8 = sbr.rel (0) target = $region5
  $region4: #{_lambda_.1} parent=0 // pred_region
    _
  $region5: #{_lambda_.1} parent=0 // pred_fallthru
    _
  // Predicated region
  $region6: #{_lambda_.1} parent=0 // pred_check
    _
  $region7: #{_lambda_.1} parent=0 // pred_check_branch
    %10 = sbr.rel (0) target = $region9
  $region8: #{_lambda_.1} parent=0 // pred_region
    _
  $region9: #{_lambda_.1} parent=0 // pred_fallthru
    _
  %v11 = vld [vmem:[%s1] sm:$0xff]
  %v12 = vld [vmem:[%s1 + $0x8] sm:$0xff]
  %v13 = vld [vmem:[%s0] sm:$0x1]
  %v14 = vld [vmem:[%s0 + $0x1] sm:$0x1]
  %v15 = vld [vmem:[%s0 + $0x2] sm:$0x1]
  %v16 = vld [vmem:[%s0 + $0x3] sm:$0x1]
  %17 = vrot.lane.b32.xlu0 %v11, 127
  %v18 = vpop.permute.xlu0 %17
  %19 = vrot.lane.b32.xlu0 %v12, 127
  %v20 = vpop.permute.xlu0 %19
  %21 = vrot.lane.b32.xlu0 %v11, 1
  %v22 = vpop.permute.xlu0 %21
  %23 = vrot.lane.b32.xlu0 %v12, 1
  %v24 = vpop.permute.xlu0 %23
  %v25 = vlaneseq
  %v26 = vshrl.u32 %v25, 7
  %v27 = vsub.s32 0, %v26
  %v28 = vrot.slane %v13, %v27
  %v29 = vmul.f32 %v28, %v11
  %v30 = vmul.f32 %v28, %v12
  %v31 = vlaneseq
  %v32 = vshrl.u32 %v31, 7
  %v33 = vsub.s32 0, %v32
  %v34 = vrot.slane %v14, %v33
  %v35 = vmul.f32 %v34, %v18
  %v36 = vmul.f32 %v34, %v20
  %v37 = vadd.f32 %v29, %v35
  %v38 = vadd.f32 %v30, %v36
  %v39 = vlaneseq
  %v40 = vshrl.u32 %v39, 7
  %v41 = vsub.s32 0, %v40
  %v42 = vrot.slane %v15, %v41
  %v43 = vmul.f32 %v42, %v22
  %v44 = vmul.f32 %v42, %v24
  %v45 = vadd.f32 %v37, %v43
  %v46 = vadd.f32 %v38, %v44
  %v47 = vlaneseq
  %v48 = vshrl.u32 %v47, 7
  %v49 = vsub.s32 0, %v48
  %v50 = vrot.slane %v16, %v49
  %v51 = vadd.f32 %v45, %v50
  %v52 = vadd.f32 %v46, %v50
  %53 = vst [vmem:[%s2] sm:$0xff] %v51
  %54 = vst [vmem:[%s2 + $0x8] sm:$0xff] %v52
  // Predicated region
  $region10: #{_lambda_.1} parent=0 // pred_check
    _
  $region11: #{_lambda_.1} parent=0 // pred_check_branch
    %56 = sbr.rel (0) target = $region13
  $region12: #{_lambda_.1} parent=0 // pred_region
    _
  $region13: #{_lambda_.1} parent=0 // pred_fallthru
    _
  // Predicated region
  $region14: #{_lambda_.1} parent=0 // pred_check
    _
  $region15: #{_lambda_.1} parent=0 // pred_check_branch
    %58 = sbr.rel (0) target = $region17
  $region16: #{_lambda_.1} parent=0 // pred_region
    _
  $region17: #{_lambda_.1} parent=0 // pred_fallthru
    _

</llo_original>
